<compile_context>
chip_gen: v5e
topology: v5e:2x2
jax: 0.10.0
libtpu: 0.0.40
codegen_flags: <defaults>
</compile_context>

<pallas_src>
import math

import jax
import jax.numpy as jnp
from jax.experimental import pallas as pl
from jax.experimental.pallas import tpu as pltpu


# ----------------------------- Pallas kernel --------------------------------
def temporal_embedding_kernel(x_ref, w_ref, t_ref, o_ref):
    # x_ref : (bb*T, C)  input rows for this batch block
    # w_ref : (C, D)     linear weight (x @ W layout), resident
    # t_ref : (bb*T, D)  fused additive table (bias + pe[:T] + time_emb), tiled bb times
    # o_ref : (bb*T, D)  output rows
    y = jnp.dot(x_ref[...], w_ref[...], preferred_element_type=jnp.float32)
    o_ref[...] = (y + t_ref[...]).astype(o_ref.dtype)


# --------------------------- block-size selection ----------------------------
def _pick_block_batch(B, T, C, D, x_itemsize, out_itemsize,
                      vmem_budget_bytes, target_rows):
    """Largest divisor bb of B whose per-step VMEM estimate fits the budget.

    Once a block already reaches `target_rows` output rows (>= ~85% of HBM
    roofline per measured tile-size sweep), we stop growing past the point
    where fewer than 2 grid steps would remain, so v7x's two TensorCores both
    get work.  (On single-TC v5e/v6e grid=1 would be marginally better, but at
    target size the difference is small.)
    """
    def step_vmem(bb):
        rows = bb * T
        vm = 2 * rows * (C * x_itemsize + D * out_itemsize)   # double-buffered x + out
        vm += 2 * C * D * x_itemsize                           # weight buffers
        vm += 2 * rows * D * 4                                 # fused f32 table buffers
        return vm

    bb = 1
    for cand in range(1, B + 1):
        if B % cand:
            continue
        # (8,128) rule: second-to-last block dim must be a multiple of 8
        # unless the block spans the full array dim.
        if (cand * T) % 8 != 0 and cand != B:
            continue
        if step_vmem(cand) > vmem_budget_bytes:
            continue
        if bb * T >= target_rows and (B // cand) < 2:
            continue   # already big enough; keep >= 2 steps for v7x megacore
        bb = cand
    return bb


# ------------------------------- wrapper -------------------------------------
def temporal_embedding(x, weight, bias, pe_full, time_emb, *,
                       out_dtype=jnp.float32,
                       use_bf16_matmul=False,
                       target_rows=2048,
                       vmem_budget_bytes=32 * 1024 * 1024,
                       vmem_limit_bytes=48 * 1024 * 1024):
    """x: (B, T, C) f32, weight: (C, D), bias: (D,), pe_full: (max_len, D),
    time_emb: (T, D).  Returns (B, T, D) in `out_dtype`."""
    B, T, C = x.shape
    D = weight.shape[1]
    assert time_emb.shape[0] == T, "TemporalEmbedding requires T == time_steps"
    assert T <= pe_full.shape[0], "sequence length exceeds positional-encoding max_len"

    # Fuse all batch-invariant additive terms into a single (T, D) f32 table.
    # (If parameters are static across calls, hoist this out of the hot path.)
    table = bias[None, :] + pe_full[:T] + time_emb                 # (T, D) f32

    if use_bf16_matmul:
        x_mm = x.astype(jnp.bfloat16)
        w_mm = weight.astype(jnp.bfloat16)
    else:                                   # default: match PyTorch f32 Linear
        x_mm = x
        w_mm = weight
    x_itemsize = jnp.dtype(x_mm.dtype).itemsize
    out_itemsize = jnp.dtype(out_dtype).itemsize

    bb = _pick_block_batch(B, T, C, D, x_itemsize, out_itemsize,
                           vmem_budget_bytes, target_rows)
    rows = bb * T
    grid = (B // bb,)

    # Contiguous reshapes/tiles in the wrapper (free / tiny), no in-kernel reshape.
    x2 = x_mm.reshape(B * T, C)
    table_tiled = jnp.tile(table, (bb, 1))                         # (bb*T, D) f32

    cost = pl.CostEstimate(
        flops=2 * B * T * C * D,
        transcendentals=0,
        bytes_accessed=int(B * T * C * x_itemsize + C * D * x_itemsize
                           + rows * D * 4 + B * T * D * out_itemsize),
    )

    out = pl.pallas_call(
        temporal_embedding_kernel,
        out_shape=jax.ShapeDtypeStruct((B * T, D), out_dtype),
        grid_spec=pltpu.PrefetchScalarGridSpec(
            num_scalar_prefetch=0,
            grid=grid,
            in_specs=[
                pl.BlockSpec((rows, C), lambda b: (b, 0)),   # x rows for this block
                pl.BlockSpec((C, D), lambda b: (0, 0)),      # weight (constant index)
                pl.BlockSpec((rows, D), lambda b: (0, 0)),   # fused table (constant index)
            ],
            out_specs=pl.BlockSpec((rows, D), lambda b: (b, 0)),
        ),
        compiler_params=pltpu.CompilerParams(
            dimension_semantics=("parallel",),
            vmem_limit_bytes=vmem_limit_bytes,
        ),
        cost_estimate=cost,
    )(x2, w_mm, table_tiled)

    return out.reshape(B, T, D)


# --------------------------- parameter construction -------------------------
def make_positional_encoding(max_len: int, d_model: int) -> jnp.ndarray:
    """Mirror of PositionalEncoding._get_positional_encoding."""
    position = jnp.arange(0, max_len, dtype=jnp.float32)[:, None]          # (L, 1)
    div_term = jnp.exp(
        jnp.arange(0, d_model, 2, dtype=jnp.float32)
        * (-(math.log(10000.0) / d_model))
    )                                                                       # (D/2,)
    angles = position * div_term                                            # (L, D/2)
    pe = jnp.zeros((max_len, d_model), dtype=jnp.float32)
    pe = pe.at[:, 0::2].set(jnp.sin(angles))
    pe = pe.at[:, 1::2].set(jnp.cos(angles))
    return pe


def init_params(key, n_channels: int, time_steps: int, d_model: int):
    k_w, k_b, k_t = jax.random.split(key, 3)
    # nn.Linear(n_channels, d_model): weight stored as (C, D) so kernel does x @ W.
    bound = 1.0 / math.sqrt(n_channels)
    weight = jax.random.uniform(k_w, (n_channels, d_model), jnp.float32, -bound, bound)
    bias = jax.random.uniform(k_b, (d_model,), jnp.float32, -bound, bound)
    # nn.Embedding(time_steps, d_model): N(0, 1); gathered at arange(time_steps),
    # so the whole table is the additive term.
    time_emb = jax.random.normal(k_t, (time_steps, d_model), jnp.float32)
    pe_full = make_positional_encoding(5000, d_model)
    return weight, bias, time_emb, pe_full


# ----------------------------------- main ------------------------------------
if __name__ == "__main__":
    B, T, C, D = 2, 8, 4, 32          # batch, time_steps (=seq len), n_channels, d_model

    key = jax.random.PRNGKey(0)
    k_x, k_p = jax.random.split(key)
    x = jax.random.normal(k_x, (B, T, C), jnp.float32)

    weight, bias, time_emb, pe_full = init_params(k_p, C, T, D)

    out = temporal_embedding(x, weight, bias, pe_full, time_emb)
    out = jax.block_until_ready(out)

    # Reference in plain JAX (f32 everywhere, matching the default kernel mode).
    pe = pe_full[:T]
    ref = x @ weight + bias[None, None, :] + pe[None, :, :] + time_emb[None, :, :]

    assert out.shape == (B, T, D)
    assert jnp.allclose(out, ref, atol=1e-4, rtol=1e-4), "mismatch vs reference"

    print("KERNEL_OK")
</pallas_src>

<mosaic_0001>
module attributes {stable_mosaic.version = 11 : i64} {
  func.func @temporal_embedding_kernel(%arg0: i32, %arg1: memref<16x4xf32, #tpu.memory_space<vmem>>, %arg2: memref<4x32xf32, #tpu.memory_space<vmem>>, %arg3: memref<16x32xf32, #tpu.memory_space<vmem>>, %arg4: memref<16x32xf32, #tpu.memory_space<vmem>>) attributes {dimension_semantics = [#tpu.dimension_semantics<parallel>], iteration_bounds = array<i64: 1>, scalar_prefetch = 0 : i64, scratch_operands = 0 : i64, tpu.core_type = #tpu.core_type<tc>, window_params = [{transform_indices = @transform_0, window_bounds = array<i64: 16, 4>}, {pipeline_mode = #tpu.pipeline_mode<synchronous>, transform_indices = @transform_1, window_bounds = array<i64: 4, 32>}, {pipeline_mode = #tpu.pipeline_mode<synchronous>, transform_indices = @transform_2, window_bounds = array<i64: 16, 32>}, {transform_indices = @transform_3, window_bounds = array<i64: 16, 32>}]} {
    %c0 = arith.constant 0 : index
    %c0_0 = arith.constant 0 : index
    %0 = vector.load %arg1[%c0, %c0_0] : memref<16x4xf32, #tpu.memory_space<vmem>>, vector<16x4xf32>
    %c0_1 = arith.constant 0 : index
    %c0_2 = arith.constant 0 : index
    %1 = vector.load %arg2[%c0_1, %c0_2] : memref<4x32xf32, #tpu.memory_space<vmem>>, vector<4x32xf32>
    %cst = arith.constant dense<0.000000e+00> : vector<16x32xf32>
    %2 = tpu.matmul %0, %1, %cst {dimension_numbers = #tpu.dot_dimension_numbers<[1], [0], [0], [1], [0, 0, 1, 1], [], []>} : vector<16x4xf32>, vector<4x32xf32>, vector<16x32xf32> -> vector<16x32xf32>
    %c0_3 = arith.constant 0 : index
    %c0_4 = arith.constant 0 : index
    %3 = vector.load %arg3[%c0_3, %c0_4] : memref<16x32xf32, #tpu.memory_space<vmem>>, vector<16x32xf32>
    %4 = arith.addf %2, %3 : vector<16x32xf32>
    %c0_5 = arith.constant 0 : index
    %c0_6 = arith.constant 0 : index
    %5 = vector.load %arg4[%c0_5, %c0_6] : memref<16x32xf32, #tpu.memory_space<vmem>>, vector<16x32xf32>
    tpu.vector_store %arg4[%c0_5, %c0_6], %4 {strides = array<i32>} : memref<16x32xf32, #tpu.memory_space<vmem>>, vector<16x32xf32>,
    return
  }
  func.func @transform_0(%arg0: i32) -> (i32, i32) {
    %c0_i32 = arith.constant 0 : i32
    %c0_i32_0 = arith.constant 0 : i32
    return %arg0, %c0_i32 : i32, i32
  }
  func.func @transform_1(%arg0: i32) -> (i32, i32) {
    %c0_i32 = arith.constant 0 : i32
    %c0_i32_0 = arith.constant 0 : i32
    %c0_i32_1 = arith.constant 0 : i32
    return %c0_i32, %c0_i32_0 : i32, i32
  }
  func.func @transform_2(%arg0: i32) -> (i32, i32) {
    %c0_i32 = arith.constant 0 : i32
    %c0_i32_0 = arith.constant 0 : i32
    %c0_i32_1 = arith.constant 0 : i32
    return %c0_i32, %c0_i32_0 : i32, i32
  }
  func.func @transform_3(%arg0: i32) -> (i32, i32) {
    %c0_i32 = arith.constant 0 : i32
    %c0_i32_0 = arith.constant 0 : i32
    return %arg0, %c0_i32 : i32, i32
  }
}

</mosaic_0001>

<llo_original>
// kernel: tpu_custom_call.1
$region0: #{tpu_custom_call.1}
  #allocation0 [shape = 'u32[]', space=smem, size = 0x4, offset = 0x4, fixed_abs, tag = 'smem constant byte address 0x4 - core index']
  #allocation1 [shape = 'u32[72,128]{1,0:T(1,128)}', space=vmem, size = 0x9000, scoped, tag = 'internal scratch']
  %s0 = inlined_call_operand.vmem [shape: f32[16,4], index: 0, kind: input, shape index: {}]
  %s1 = inlined_call_operand.vmem [shape: f32[4,32], index: 1, kind: input, shape index: {}]
  %s2 = inlined_call_operand.vmem [shape: f32[16,32], index: 2, kind: input, shape index: {}]
  %s3 = inlined_call_operand.hbm [shape: f32[16,32], index: 3, kind: output, shape index: {}]
  %s4 = sld [smem:[#allocation0]]
  $region22: #{tpu_custom_call.1} parent=0
    _
  %s6 = ssub.s32 1, %s4
  %s7 = scalar_select 0, %s6, %s4
  $region1: #{tpu_custom_call.1} parent=0
    #allocation2 [shape = 'u8[8192]{0}', space=vmem, size = 0x2000, scoped, tag = 'output window, operand 0, single buffered']
    #allocation3 [shape = 's32[1]{0}', space=sflag, size = 0x4, scoped, tag = 'scoped memory for tpu_custom_call.1']
    %8 = vsyncpa [#allocation3], 0
    // Predicated region
    $region2: #{tpu_custom_call.1} parent=1 // pred_check
      _
    $region3: #{tpu_custom_call.1} parent=1 // pred_check_branch
      %10 = sbr.rel (0) target = $region5
    $region4: #{tpu_custom_call.1} parent=1 // pred_region
      _
    $region5: #{tpu_custom_call.1} parent=1 // pred_fallthru
      _
    // Predicated region
    $region6: #{tpu_custom_call.1} parent=1 // pred_check
      _
    $region7: #{tpu_custom_call.1} parent=1 // pred_check_branch
      %12 = sbr.rel (0) target = $region9
    $region8: #{tpu_custom_call.1} parent=1 // pred_region
      _
    $region9: #{tpu_custom_call.1} parent=1 // pred_fallthru
      _
    // Predicated region
    $region10: #{tpu_custom_call.1} parent=1 // pred_check
      _
    $region11: #{tpu_custom_call.1} parent=1 // pred_check_branch
      %14 = sbr.rel (0) target = $region13
    $region12: #{tpu_custom_call.1} parent=1 // pred_region
      _
    $region13: #{tpu_custom_call.1} parent=1 // pred_fallthru
      _
    %v15 = vld [vmem:[%s0] sm:$0xff]
    %v16 = vld [vmem:[%s0 + $0x8] sm:$0xff]
    %v17 = vld [vmem:[%s1] sm:$0xf]
    %v18 = vld [vmem:[%s2] sm:$0xff]
    %v19 = vld [vmem:[%s2 + $0x8] sm:$0xff]
    %vm20 = vcmask 31744
    %v22 = vsel %vm20, %v15, 0
    %v25 = vsel %vm20, %v16, 0
    %vm27 = vcmask 1043456
    %v29 = vsel %vm27, %v17, 0
    %31 = vmatpush.msra.mxu0 0.0
    %32 = vmatpush.msra.mxu0 0.0
    %33 = vmatpush.msra.mxu0 0.0
    %34 = vmatpush.msra.mxu0 0.0
    %35 = vmatpush.msra.mxu0 0.0
    %36 = vmatpush.msra.mxu0 0.0
    %37 = vmatpush.msra.mxu0 0.0
    %38 = vmatpush.msra.mxu0 0.0
    %39 = vmatpush.msra.mxu0 0.0
    %40 = vmatpush.msra.mxu0 0.0
    %41 = vmatpush.msra.mxu0 0.0
    %42 = vmatpush.msra.mxu0 0.0
    %43 = vmatpush.msra.mxu0 0.0
    %44 = vmatpush.msra.mxu0 0.0
    %45 = vmatpush.msra.mxu0 0.0
    %46 = vmatpush.msra.mxu0 %v29
    %47 = vmatmul.f32.gmra.mxu0 %v22
    %v48 = vpop.f32.mrf.mxu0
    %v49 = vadd.f32 %v18, %v48
    %50 = vmatmul.f32.gmra.mxu0 %v25
    %v51 = vpop.f32.mrf.mxu0
    %v52 = vadd.f32 %v19, %v51
    %53 = vdwg.mxu0
    %vm54 = vcmask 261120
    %55 = vst.msk [vmem:[#allocation2] sm:$0xff] %vm54, %v49
    %56 = vst.msk [vmem:[#allocation2 + $0x8] sm:$0xff] %vm54, %v52
    // Predicated region
    $region14: #{tpu_custom_call.1} parent=1 // pred_check
      _
    $region15: #{tpu_custom_call.1} parent=1 // pred_check_branch
      %58 = sbr.rel (0) target = $region17
    $region16: #{tpu_custom_call.1} parent=1 // pred_region
      %60 = vsyncadd [#allocation3], 0
      %s61 = sshll.u32 [#allocation2], 4
      %s62 = int_to_ptr.vmem [resolvable:$true] %s61
      %s63 = sshll.u32 %s3, 4
      %s64 = int_to_ptr.hbm [resolvable:$true] %s63
      %69 = dma.vmem_to_hbm [thread:$0]  %s62, 256, %s64, [#allocation3], 128, 128, 8
    $region17: #{tpu_custom_call.1} parent=1 // pred_fallthru
      _
    // Predicated region
    $region18: #{tpu_custom_call.1} parent=1 // pred_check
      _
    $region19: #{tpu_custom_call.1} parent=1 // pred_check_branch
      %71 = sbr.rel (0) target = $region21
    $region20: #{tpu_custom_call.1} parent=1 // pred_region
      %73 = dma.done [#allocation3], 256
    $region21: #{tpu_custom_call.1} parent=1 // pred_fallthru
      _
    %74 = vsyncpa [#allocation3], 1

</llo_original>
